<compile_context>
chip_gen: v7x
topology: tpu7x:2x2x1
jax: 0.10.0
libtpu: 0.0.40
codegen_flags: <defaults>
</compile_context>

<pallas_src>
import jax
import jax.numpy as jnp
import numpy as np
from jax.experimental import pallas as pl
from jax.experimental.pallas import tpu as pltpu  # noqa: F401  (TPU backend)

# ---- small, fixed problem sizes (consistent with the module's __init__) ----
N, H, W = 2, 16, 16          # batch, spatial
CIN, COUT = 4, 8             # in_channels, out_channels
KH, KW = 3, 3                # kernel_size
SH, SW = 1, 1                # stride
PH, PW = (KH - 1) // 2, (KW - 1) // 2   # padding = (k-1)//2 (module default)
HO = (H + 2 * PH - KH) // SH + 1
WO = (W + 2 * PW - KW) // SW + 1
HWO = HO * WO                # 256 -> per-sample lane extent of the output
KK = KH * KW * CIN           # 36  -> contraction (K) axis of the single matmul
NP = N * HWO                 # 512 -> lane axis of the matmul
EPS = 1e-5                   # nn.BatchNorm2d default eps
NEG_SLOPE = 0.01             # nn.LeakyReLU default negative_slope


def encoder_kernel(wgb_ref, col_ref, o_ref):
    """Fused  W @ im2col  +  BatchNorm2d(training stats)  +  LeakyReLU.

    wgb_ref : (COUT, KK+2)  cols [0:KK] conv weight (kh,kw,cin), col KK = BN
              gamma, col KK+1 = BN beta  (merged to save one operand DMA)
    col_ref : (KK, NP)      im2col patches, cols ordered (n, ho, wo)
    o_ref   : (N, COUT, HWO) output — stored as N static lane-dense 8x256
              slabs, so the wrapper's NCHW reshape is free (no transpose).
    """
    # Single MXU matmul: (8, 36) x (36, 512) -> (8, 512), f32 accumulation.
    # (Conv bias omitted: cancelled exactly by the BN mean subtraction.)
    conv = jnp.dot(wgb_ref[:, 0:KK], col_ref[...],
                   preferred_element_type=jnp.float32)

    # BatchNorm2d, training mode: one-pass biased batch statistics per channel.
    inv_np = jnp.float32(1.0 / NP)
    s = jnp.sum(conv, axis=1, keepdims=True)                   # (COUT, 1)
    ss = jnp.sum(conv * conv, axis=1, keepdims=True)           # (COUT, 1)
    mean = s * inv_np
    var = ss * inv_np - mean * mean                            # E[x^2]-E[x]^2

    gamma = wgb_ref[:, KK:KK + 1]
    beta = wgb_ref[:, KK + 1:KK + 2]
    scale = jax.lax.rsqrt(var + EPS) * gamma                   # gamma folded
    shift = beta - mean * scale
    y = conv * scale + shift                                   # one FMA/elem

    # LeakyReLU: slope in (0,1)  =>  max(y, slope*y) is exact.
    y = jnp.maximum(y, NEG_SLOPE * y)

    # Store directly in (N, COUT, HO*WO) layout: N static 256-lane stores.
    for n in range(N):
        o_ref[n] = y[:, n * HWO:(n + 1) * HWO]


def encoder_forward(x_nchw, w_oihw, bias, gamma, beta):
    """PyTorch-equivalent forward: x is NCHW, weight is OIHW.

    `bias` is accepted for signature parity but unused: a per-channel constant
    added before training-mode BatchNorm is exactly removed by the mean
    subtraction, so dropping it is mathematically equivalent.
    """
    del bias

    # --- layout plumbing (tiny, XLA-side): build the im2col RHS -------------
    # columns ordered (n, ho, wo) on the lane axis, rows ordered (kh, kw, cin).
    x_cn = jnp.transpose(x_nchw, (1, 0, 2, 3))                     # (CIN,N,H,W)
    xpad = jnp.pad(x_cn, ((0, 0), (0, 0), (PH, PH), (PW, PW)))     # zeros pad
    col = jnp.stack(
        [xpad[:, :, kh:kh + HO * SH:SH, kw:kw + WO * SW:SW]
         for kh in range(KH) for kw in range(KW)],
        axis=0)                                                    # (KH*KW, CIN, N, HO, WO)
    col = col.reshape(KK, NP)                                      # (36, 512)

    # weight rows must match col's (kh, kw, cin) ordering; merge gamma/beta in
    w_mat = jnp.transpose(w_oihw, (0, 2, 3, 1)).reshape(COUT, KK)  # (8, 36)
    wgb = jnp.concatenate([w_mat, gamma[:, None], beta[:, None]],
                          axis=1)                                  # (8, 38)

    # --- fused kernel: single invocation, whole arrays in VMEM, no grid -----
    out = pl.pallas_call(
        encoder_kernel,
        out_shape=jax.ShapeDtypeStruct((N, COUT, HWO), jnp.float32),
    )(wgb, col)

    # (N, COUT, HO*WO) -> NCHW: a free reshape, no transpose.
    return out.reshape(N, COUT, HO, WO)


def encoder_reference(x_nchw, w_oihw, bias, gamma, beta):
    """Pure-JAX reference reproducing the PyTorch forward (bias included)."""
    y = jax.lax.conv_general_dilated(
        x_nchw, w_oihw, window_strides=(SH, SW),
        padding=((PH, PH), (PW, PW)),
        dimension_numbers=('NCHW', 'OIHW', 'NCHW'))
    y = y + bias.reshape(1, COUT, 1, 1)
    mean = jnp.mean(y, axis=(0, 2, 3), keepdims=True)
    var = jnp.mean((y - mean) ** 2, axis=(0, 2, 3), keepdims=True)
    y = (y - mean) * jax.lax.rsqrt(var + EPS) \
        * gamma.reshape(1, COUT, 1, 1) + beta.reshape(1, COUT, 1, 1)
    return jnp.where(y > 0, y, NEG_SLOPE * y)


if __name__ == "__main__":
    key = jax.random.PRNGKey(0)
    kx, kw, kb, kg, kbt = jax.random.split(key, 5)

    # deterministic synthetic parameters (shapes from the module __init__)
    x = jax.random.normal(kx, (N, CIN, H, W), jnp.float32)
    w = jax.random.normal(kw, (COUT, CIN, KH, KW), jnp.float32) * 0.1
    bias = jax.random.normal(kb, (COUT,), jnp.float32) * 0.1
    gamma = 1.0 + 0.1 * jax.random.normal(kg, (COUT,), jnp.float32)
    beta = 0.1 * jax.random.normal(kbt, (COUT,), jnp.float32)

    out = jax.block_until_ready(encoder_forward(x, w, bias, gamma, beta))
    ref = jax.block_until_ready(encoder_reference(x, w, bias, gamma, beta))

    np.testing.assert_allclose(np.asarray(out), np.asarray(ref),
                               rtol=1e-4, atol=1e-4)
    print("KERNEL_OK")
</pallas_src>

<mosaic_0001>
module attributes {stable_mosaic.version = 11 : i64} {
  func.func @encoder_kernel(%arg0: memref<8x38xf32, #tpu.memory_space<vmem>>, %arg1: memref<36x512xf32, #tpu.memory_space<vmem>>, %arg2: memref<2x8x256xf32, #tpu.memory_space<vmem>>) attributes {dimension_semantics = [], scalar_prefetch = 0 : i64, scratch_operands = 0 : i64, tpu.core_type = #tpu.core_type<tc>} {
    %c0 = arith.constant 0 : index
    %c0_0 = arith.constant 0 : index
    %0 = vector.load %arg0[%c0, %c0_0] : memref<8x38xf32, #tpu.memory_space<vmem>>, vector<8x36xf32>
    %c0_1 = arith.constant 0 : index
    %c0_2 = arith.constant 0 : index
    %1 = vector.load %arg1[%c0_1, %c0_2] : memref<36x512xf32, #tpu.memory_space<vmem>>, vector<36x512xf32>
    %cst = arith.constant dense<0.000000e+00> : vector<8x512xf32>
    %2 = tpu.matmul %0, %1, %cst {dimension_numbers = #tpu.dot_dimension_numbers<[1], [0], [0], [1], [0, 0, 1, 1], [], []>} : vector<8x36xf32>, vector<36x512xf32>, vector<8x512xf32> -> vector<8x512xf32>
    %cst_3 = arith.constant dense<0.000000e+00> : vector<8xf32>
    %3 = vector.multi_reduction <add>, %2, %cst_3 [1] : vector<8x512xf32> to vector<8xf32>
    %4 = vector.shape_cast %3 : vector<8xf32> to vector<8x1xf32>
    %5 = arith.mulf %2, %2 : vector<8x512xf32>
    %cst_4 = arith.constant dense<0.000000e+00> : vector<8xf32>
    %6 = vector.multi_reduction <add>, %5, %cst_4 [1] : vector<8x512xf32> to vector<8xf32>
    %7 = vector.shape_cast %6 : vector<8xf32> to vector<8x1xf32>
    %cst_5 = arith.constant 0.001953125 : f32
    %8 = vector.broadcast %cst_5 : f32 to vector<8x1xf32>
    %9 = arith.mulf %4, %8 : vector<8x1xf32>
    %cst_6 = arith.constant 0.001953125 : f32
    %10 = vector.broadcast %cst_6 : f32 to vector<8x1xf32>
    %11 = arith.mulf %7, %10 : vector<8x1xf32>
    %12 = arith.mulf %9, %9 : vector<8x1xf32>
    %13 = arith.subf %11, %12 : vector<8x1xf32>
    %c0_7 = arith.constant 0 : index
    %c36 = arith.constant 36 : index
    %14 = vector.load %arg0[%c0_7, %c36] : memref<8x38xf32, #tpu.memory_space<vmem>>, vector<8x1xf32>
    %c0_8 = arith.constant 0 : index
    %c37 = arith.constant 37 : index
    %15 = vector.load %arg0[%c0_8, %c37] : memref<8x38xf32, #tpu.memory_space<vmem>>, vector<8x1xf32>
    %cst_9 = arith.constant 9.99999974E-6 : f32
    %16 = vector.broadcast %cst_9 : f32 to vector<8x1xf32>
    %17 = arith.addf %13, %16 : vector<8x1xf32>
    %18 = math.rsqrt %17 : vector<8x1xf32>
    %19 = arith.mulf %18, %14 : vector<8x1xf32>
    %20 = arith.mulf %9, %19 : vector<8x1xf32>
    %21 = arith.subf %15, %20 : vector<8x1xf32>
    %22 = vector.broadcast %19 : vector<8x1xf32> to vector<8x512xf32>
    %23 = arith.mulf %2, %22 : vector<8x512xf32>
    %24 = vector.broadcast %21 : vector<8x1xf32> to vector<8x512xf32>
    %25 = arith.addf %23, %24 : vector<8x512xf32>
    %cst_10 = arith.constant 0.00999999977 : f32
    %26 = vector.broadcast %cst_10 : f32 to vector<8x512xf32>
    %27 = arith.mulf %26, %25 : vector<8x512xf32>
    %28 = arith.maximumf %25, %27 : vector<8x512xf32>
    %29 = vector.extract_strided_slice %28 {offsets = [0, 0], sizes = [8, 256], strides = [1, 1]} : vector<8x512xf32> to vector<8x256xf32>
    %c0_11 = arith.constant 0 : index
    %c0_12 = arith.constant 0 : index
    %c0_13 = arith.constant 0 : index
    %30 = vector.load %arg2[%c0_11, %c0_12, %c0_13] : memref<2x8x256xf32, #tpu.memory_space<vmem>>, vector<1x8x256xf32>
    %31 = vector.shape_cast %30 : vector<1x8x256xf32> to vector<8x256xf32>
    %32 = vector.shape_cast %29 : vector<8x256xf32> to vector<1x8x256xf32>
    tpu.vector_store %arg2[%c0_11, %c0_12, %c0_13], %32 {strides = array<i32>} : memref<2x8x256xf32, #tpu.memory_space<vmem>>, vector<1x8x256xf32>,
    %33 = vector.extract_strided_slice %28 {offsets = [0, 256], sizes = [8, 256], strides = [1, 1]} : vector<8x512xf32> to vector<8x256xf32>
    %c1 = arith.constant 1 : index
    %c0_14 = arith.constant 0 : index
    %c0_15 = arith.constant 0 : index
    %34 = vector.load %arg2[%c1, %c0_14, %c0_15] : memref<2x8x256xf32, #tpu.memory_space<vmem>>, vector<1x8x256xf32>
    %35 = vector.shape_cast %34 : vector<1x8x256xf32> to vector<8x256xf32>
    %36 = vector.shape_cast %33 : vector<8x256xf32> to vector<1x8x256xf32>
    tpu.vector_store %arg2[%c1, %c0_14, %c0_15], %36 {strides = array<i32>} : memref<2x8x256xf32, #tpu.memory_space<vmem>>, vector<1x8x256xf32>,
    return
  }
}

</mosaic_0001>

<llo_original>
// kernel: tpu_custom_call.1
$region0: #{tpu_custom_call.1}
  #allocation0 [shape = 'u32[]', space=smem, size = 0x4, offset = 0x4, fixed_abs, tag = 'smem constant byte address 0x4 - core index']
  #allocation1 [shape = 'u32[144,128]{1,0:T(1,128)}', space=vmem, size = 0x12000, scoped, tag = 'internal scratch']
  %s0 = inlined_call_operand.hbm [shape: f32[8,38], index: 0, kind: input, shape index: {}]
  %s1 = inlined_call_operand.hbm [shape: f32[36,512], index: 1, kind: input, shape index: {}]
  %s2 = inlined_call_operand.hbm [shape: f32[2,8,256], index: 2, kind: output, shape index: {}]
  %s3 = sld [smem:[#allocation0]]
  $region26: #{tpu_custom_call.1} parent=0
    _
  %s5 = ssub.s32 1, %s3
  %s6 = scalar_select 0, %s5, %s3
  $region1: #{tpu_custom_call.1} parent=0
    #allocation2 [shape = 'u8[4096]{0}', space=vmem, size = 0x1000, scoped, tag = 'input window, operand 0, single buffered']
    #allocation3 [shape = 's32[1]{0}', space=sflag, size = 0x4, scoped, tag = 'scoped memory for tpu_custom_call.1']
    #allocation4 [shape = 's32[1]{0}', space=sflag, size = 0x4, scoped, tag = 'scoped memory for tpu_custom_call.1']
    #allocation5 [shape = 'u8[81920]{0}', space=vmem, size = 0x14000, scoped, tag = 'input window, operand 1, single buffered']
    #allocation6 [shape = 's32[1]{0}', space=sflag, size = 0x4, scoped, tag = 'scoped memory for tpu_custom_call.1']
    #allocation7 [shape = 'u8[16384]{0}', space=vmem, size = 0x4000, scoped, tag = 'output window, operand 0, single buffered']
    %7 = vsyncpa [#allocation3], 0
    %8 = vsyncpa [#allocation6], 0
    %9 = vsyncpa [#allocation4], 0
    // Predicated region
    $region2: #{tpu_custom_call.1} parent=1 // pred_check
      _
    $region3: #{tpu_custom_call.1} parent=1 // pred_check_branch
      %11 = sbr.rel (0) target = $region5
    $region4: #{tpu_custom_call.1} parent=1 // pred_region
      %s13 = ssub.s32 128, 128
      %14 = vsyncadd [#allocation3], %s13
      %s16 = sshll.u32 [#allocation2], 4
      %s17 = int_to_ptr.vmem [resolvable:$true] %s16
      %19 = dma.hbm_to_vmem [thread:$0]  %s0, 128, %s17, [#allocation3]
    $region5: #{tpu_custom_call.1} parent=1 // pred_fallthru
      _
    // Predicated region
    $region6: #{tpu_custom_call.1} parent=1 // pred_check
      _
    $region7: #{tpu_custom_call.1} parent=1 // pred_check_branch
      %21 = sbr.rel (0) target = $region9
    $region8: #{tpu_custom_call.1} parent=1 // pred_region
      %s23 = ssub.s32 2560, 2560
      %24 = vsyncadd [#allocation6], %s23
      %s25 = sshll.u32 [#allocation5], 4
      %s26 = int_to_ptr.vmem [resolvable:$true] %s25
      %31 = dma.hbm_to_vmem [thread:$0]  %s1, 2560, %s26, [#allocation6], 512, 512, 32
    $region9: #{tpu_custom_call.1} parent=1 // pred_fallthru
      _
    // Predicated region
    $region10: #{tpu_custom_call.1} parent=1 // pred_check
      _
    $region11: #{tpu_custom_call.1} parent=1 // pred_check_branch
      %33 = sbr.rel (0) target = $region13
    $region12: #{tpu_custom_call.1} parent=1 // pred_region
      %34 = dma.done [#allocation3], 128
    $region13: #{tpu_custom_call.1} parent=1 // pred_fallthru
      _
    // Predicated region
    $region14: #{tpu_custom_call.1} parent=1 // pred_check
      _
    $region15: #{tpu_custom_call.1} parent=1 // pred_check_branch
      %36 = sbr.rel (0) target = $region17
    $region16: #{tpu_custom_call.1} parent=1 // pred_region
      %37 = dma.done [#allocation6], 2560
    $region17: #{tpu_custom_call.1} parent=1 // pred_fallthru
      _
    %v38 = vld [vmem:[#allocation2] sm:$0xff]
    %v39 = vld [vmem:[#allocation5] sm:$0xff]
    %v40 = vld [vmem:[#allocation5 + $0x8] sm:$0xff]
    %v41 = vld [vmem:[#allocation5 + $0x10] sm:$0xff]
    %v42 = vld [vmem:[#allocation5 + $0x18] sm:$0xff]
    %v43 = vld [vmem:[#allocation5 + $0x20] sm:$0xff]
    %v44 = vld [vmem:[#allocation5 + $0x28] sm:$0xff]
    %v45 = vld [vmem:[#allocation5 + $0x30] sm:$0xff]
    %v46 = vld [vmem:[#allocation5 + $0x38] sm:$0xff]
    %v47 = vld [vmem:[#allocation5 + $0x40] sm:$0xff]
    %v48 = vld [vmem:[#allocation5 + $0x48] sm:$0xff]
    %v49 = vld [vmem:[#allocation5 + $0x50] sm:$0xff]
    %v50 = vld [vmem:[#allocation5 + $0x58] sm:$0xff]
    %v51 = vld [vmem:[#allocation5 + $0x60] sm:$0xff]
    %v52 = vld [vmem:[#allocation5 + $0x68] sm:$0xff]
    %v53 = vld [vmem:[#allocation5 + $0x70] sm:$0xff]
    %v54 = vld [vmem:[#allocation5 + $0x78] sm:$0xff]
    %v55 = vld [vmem:[#allocation5 + $0x80] sm:$0xf]
    %v56 = vld [vmem:[#allocation5 + $0x88] sm:$0xf]
    %v57 = vld [vmem:[#allocation5 + $0x90] sm:$0xf]
    %v58 = vld [vmem:[#allocation5 + $0x98] sm:$0xf]
    %vm59 = vcmask 293888
    %v61 = vsel %vm59, %v38, 0
    %vm63 = vcmask 1043456
    %v65 = vsel %vm63, %v55, 0
    %v68 = vsel %vm63, %v56, 0
    %v71 = vsel %vm63, %v57, 0
    %v74 = vsel %vm63, %v58, 0
    %76 = vmatprep.subr.mxu0 %v40
    %77 = vmatpush1.msra.mxu0 %v39
    %78 = vmatprep.subr.mxu0 %v44
    %79 = vmatpush1.msra.mxu0 %v43
    %80 = vmatprep.subr.mxu0 %v48
    %81 = vmatpush1.msra.mxu0 %v47
    %82 = vmatprep.subr.mxu0 %v52
    %83 = vmatpush1.msra.mxu0 %v51
    %84 = vmatprep.subr.mxu0 %v68
    %85 = vmatpush1.msra.mxu0 %v65
    %86 = vmatprep.subr.mxu0 0.0
    %87 = vmatpush1.msra.mxu0 0.0
    %88 = vmatprep.subr.mxu0 0.0
    %89 = vmatpush1.msra.mxu0 0.0
    %90 = vmatprep.subr.mxu0 0.0
    %91 = vmatpush1.msra.mxu0 0.0
    %92 = vmatprep.subr.mxu0 0.0
    %93 = vmatpush1.msra.mxu0 0.0
    %94 = vmatprep.subr.mxu0 0.0
    %95 = vmatpush1.msra.mxu0 0.0
    %96 = vmatprep.subr.mxu0 0.0
    %97 = vmatpush1.msra.mxu0 0.0
    %98 = vmatprep.subr.mxu0 0.0
    %99 = vmatpush1.msra.mxu0 0.0
    %100 = vmatprep.subr.mxu0 0.0
    %101 = vmatpush1.msra.mxu0 0.0
    %102 = vmatprep.subr.mxu0 0.0
    %103 = vmatpush1.msra.mxu0 0.0
    %104 = vmatprep.subr.mxu0 0.0
    %105 = vmatpush1.msra.mxu0 0.0
    %106 = vmatprep.subr.mxu0 0.0
    %107 = vmatpush1.msra.mxu0 0.0
    %108 = vmatprep.subr.mxu0 0.0
    %109 = vmatpush1.msra.mxu0 0.0
    %110 = vmatprep.subr.mxu0 0.0
    %111 = vmatpush1.msra.mxu0 0.0
    %112 = vmatprep.subr.mxu0 0.0
    %113 = vmatpush1.msra.mxu0 0.0
    %114 = vmatprep.subr.mxu0 0.0
    %115 = vmatpush1.msra.mxu0 0.0
    %116 = vmatprep.subr.mxu0 0.0
    %117 = vmatpush1.msra.mxu0 0.0
    %118 = vmatprep.subr.mxu0 0.0
    %119 = vmatpush1.msra.mxu0 0.0
    %120 = vmatprep.subr.mxu0 0.0
    %121 = vmatpush1.msra.mxu0 0.0
    %122 = vmatprep.subr.mxu0 0.0
    %123 = vmatpush1.msra.mxu0 0.0
    %124 = vmatprep.subr.mxu0 0.0
    %125 = vmatpush1.msra.mxu0 0.0
    %126 = vmatprep.subr.mxu0 0.0
    %127 = vmatpush1.msra.mxu0 0.0
    %128 = vmatprep.subr.mxu0 0.0
    %129 = vmatpush1.msra.mxu0 0.0
    %130 = vmatprep.subr.mxu0 0.0
    %131 = vmatpush1.msra.mxu0 0.0
    %132 = vmatprep.subr.mxu0 0.0
    %133 = vmatpush1.msra.mxu0 0.0
    %134 = vmatprep.subr.mxu0 0.0
    %135 = vmatpush1.msra.mxu0 0.0
    %136 = vmatprep.subr.mxu0 0.0
    %137 = vmatpush1.msra.mxu0 0.0
    %138 = vmatprep.subr.mxu0 0.0
    %139 = vmatpush1.msra.mxu0 0.0
    %140 = vmatprep.mubr.f32.mxu0 0.0
    %141 = vmatmul.mubr.f32.gmra.mrb[0].mxu0 %v61
    %v142 = vpop.f32.mrb[0].mxu0
    %v143 = vadd.f32 0.0, %v142
    %v144 = vpop.f32.mrb[0].mxu0
    %v145 = vadd.f32 0.0, %v144
    %146 = vdwg.mxu0
    %147 = vmatprep.subr.mxu0 %v42
    %148 = vmatpush1.msra.mxu0 %v41
    %149 = vmatprep.subr.mxu0 %v46
    %150 = vmatpush1.msra.mxu0 %v45
    %151 = vmatprep.subr.mxu0 %v50
    %152 = vmatpush1.msra.mxu0 %v49
    %153 = vmatprep.subr.mxu0 %v54
    %154 = vmatpush1.msra.mxu0 %v53
    %155 = vmatprep.subr.mxu0 %v74
    %156 = vmatpush1.msra.mxu0 %v71
    %157 = vmatprep.subr.mxu0 0.0
    %158 = vmatpush1.msra.mxu0 0.0
    %159 = vmatprep.subr.mxu0 0.0
    %160 = vmatpush1.msra.mxu0 0.0
    %161 = vmatprep.subr.mxu0 0.0
    %162 = vmatpush1.msra.mxu0 0.0
    %163 = vmatprep.subr.mxu0 0.0
    %164 = vmatpush1.msra.mxu0 0.0
    %165 = vmatprep.subr.mxu0 0.0
    %166 = vmatpush1.msra.mxu0 0.0
    %167 = vmatprep.subr.mxu0 0.0
    %168 = vmatpush1.msra.mxu0 0.0
    %169 = vmatprep.subr.mxu0 0.0
    %170 = vmatpush1.msra.mxu0 0.0
    %171 = vmatprep.subr.mxu0 0.0
    %172 = vmatpush1.msra.mxu0 0.0
    %173 = vmatprep.subr.mxu0 0.0
    %174 = vmatpush1.msra.mxu0 0.0
    %175 = vmatprep.subr.mxu0 0.0
    %176 = vmatpush1.msra.mxu0 0.0
    %177 = vmatprep.subr.mxu0 0.0
    %178 = vmatpush1.msra.mxu0 0.0
    %179 = vmatprep.subr.mxu0 0.0
    %180 = vmatpush1.msra.mxu0 0.0
    %181 = vmatprep.subr.mxu0 0.0
    %182 = vmatpush1.msra.mxu0 0.0
    %183 = vmatprep.subr.mxu0 0.0
    %184 = vmatpush1.msra.mxu0 0.0
    %185 = vmatprep.subr.mxu0 0.0
    %186 = vmatpush1.msra.mxu0 0.0
    %187 = vmatprep.subr.mxu0 0.0
    %188 = vmatpush1.msra.mxu0 0.0
    %189 = vmatprep.subr.mxu0 0.0
    %190 = vmatpush1.msra.mxu0 0.0
    %191 = vmatprep.subr.mxu0 0.0
    %192 = vmatpush1.msra.mxu0 0.0
    %193 = vmatprep.subr.mxu0 0.0
    %194 = vmatpush1.msra.mxu0 0.0
    %195 = vmatprep.subr.mxu0 0.0
    %196 = vmatpush1.msra.mxu0 0.0
    %197 = vmatprep.subr.mxu0 0.0
    %198 = vmatpush1.msra.mxu0 0.0
    %199 = vmatprep.subr.mxu0 0.0
    %200 = vmatpush1.msra.mxu0 0.0
    %201 = vmatprep.subr.mxu0 0.0
    %202 = vmatpush1.msra.mxu0 0.0
    %203 = vmatprep.subr.mxu0 0.0
    %204 = vmatpush1.msra.mxu0 0.0
    %205 = vmatprep.subr.mxu0 0.0
    %206 = vmatpush1.msra.mxu0 0.0
    %207 = vmatprep.subr.mxu0 0.0
    %208 = vmatpush1.msra.mxu0 0.0
    %209 = vmatprep.subr.mxu0 0.0
    %210 = vmatpush1.msra.mxu0 0.0
    %211 = vmatprep.mubr.f32.mxu0 0.0
    %212 = vmatmul.mubr.f32.gmra.mrb[0].mxu0 %v61
    %v213 = vpop.f32.mrb[0].mxu0
    %v214 = vadd.f32 0.0, %v213
    %v215 = vpop.f32.mrb[0].mxu0
    %v216 = vadd.f32 0.0, %v215
    %217 = vdwg.mxu0
    %v218 = vadd.f32 %v143, %v145
    %v219 = vadd.f32 %v218, %v214
    %v220 = vadd.f32 %v219, %v216
    %221 = vadd.xlane.f32.xlu0 %v220
    %v222 = vpop.xlane.xlu0 %221
    %v223 = vmul.f32 %v143, %v143
    %v224 = vmul.f32 %v145, %v145
    %v225 = vmul.f32 %v214, %v214
    %v226 = vmul.f32 %v216, %v216
    %v227 = vadd.f32 %v223, %v224
    %v228 = vadd.f32 %v227, %v225
    %v229 = vadd.f32 %v228, %v226
    %230 = vadd.xlane.f32.xlu0 %v229
    %v231 = vpop.xlane.xlu0 %230
    %v232 = vmul.f32 %v222, 0.001953125
    %v233 = vmul.f32 %v231, 0.001953125
    %v234 = vmul.f32 %v232, %v232
    %v235 = vsub.f32 %v233, %v234
    %v236 = vadd.f32 %v235, 1e-05
    %v237 = vrsqrt.pop %v236
    %v238 = vmul.f32 %v237, %v38
    %v239 = vmul.f32 %v232, %v238
    %241 = vrot.lane.b32.xlu0 %v239, 1
    %v242 = vpop.permute.xlu0 %241
    %v244 = vsub.f32 %v38, %v242
    %246 = vset.pattern.permute.xlu0 36
    %247 = vperm.xlu0 %246, %v238
    %v248 = vpop.permute.xlu0 %247
    %v250 = vmul.f32 %v143, %v248
    %v251 = vmul.f32 %v145, %v248
    %v252 = vmul.f32 %v214, %v248
    %v253 = vmul.f32 %v216, %v248
    %255 = vset.pattern.permute.xlu0 37
    %256 = vperm.xlu0 %255, %v244
    %v257 = vpop.permute.xlu0 %256
    %v259 = vadd.f32 %v250, %v257
    %v260 = vadd.f32 %v251, %v257
    %v261 = vadd.f32 %v252, %v257
    %v262 = vadd.f32 %v253, %v257
    %v263 = vmul.f32 %v259, 0.01
    %v264 = vmul.f32 %v260, 0.01
    %v265 = vmul.f32 %v261, 0.01
    %v266 = vmul.f32 %v262, 0.01
    %v267 = vmax.f32 %v259, %v263
    %v268 = vmax.f32 %v260, %v264
    %v269 = vmax.f32 %v261, %v265
    %v270 = vmax.f32 %v262, %v266
    %271 = vst [vmem:[#allocation7] sm:$0xff] %v267
    %272 = vst [vmem:[#allocation7 + $0x8] sm:$0xff] %v268
    %s273 = scalar_lea.vmem [#allocation7], 16
    %274 = vst [vmem:[%s273] sm:$0xff] %v269
    %275 = vst [vmem:[%s273 + $0x8] sm:$0xff] %v270
    // Predicated region
    $region18: #{tpu_custom_call.1} parent=1 // pred_check
      _
    $region19: #{tpu_custom_call.1} parent=1 // pred_check_branch
      %277 = sbr.rel (0) target = $region21
    $region20: #{tpu_custom_call.1} parent=1 // pred_region
      %s279 = ssub.s32 512, 512
      %280 = vsyncadd [#allocation4], %s279
      %s281 = sshll.u32 [#allocation7], 4
      %s282 = int_to_ptr.vmem [resolvable:$true] %s281
      %287 = dma.vmem_to_hbm [thread:$0]  %s282, 512, %s2, [#allocation4], 256, 256, 16
    $region21: #{tpu_custom_call.1} parent=1 // pred_fallthru
      _
    // Predicated region
    $region22: #{tpu_custom_call.1} parent=1 // pred_check
      _
    $region23: #{tpu_custom_call.1} parent=1 // pred_check_branch
      %289 = sbr.rel (0) target = $region25
    $region24: #{tpu_custom_call.1} parent=1 // pred_region
      %290 = dma.done [#allocation4], 512
    $region25: #{tpu_custom_call.1} parent=1 // pred_fallthru
      _
    %291 = vsyncpa [#allocation3], 1
    %292 = vsyncpa [#allocation6], 1
    %293 = vsyncpa [#allocation4], 1

</llo_original>
